<compile_context>
chip_gen: v5e
topology: v5e:2x2
jax: 0.10.0
libtpu: 0.0.40
codegen_flags: <defaults>
</compile_context>

<pallas_src>
import math

import jax
import jax.numpy as jnp
from jax import lax
from jax.experimental import pallas as pl
from jax.experimental.pallas import tpu as pltpu


def _round_up(x: int, m: int) -> int:
    return ((x + m - 1) // m) * m


def _build_pe_table(d_model: int, max_len: int) -> jnp.ndarray:
    """Deterministic sinusoidal positional-encoding table [max_len, d_model]."""
    position = jnp.arange(max_len, dtype=jnp.float32)[:, None]
    div_term = jnp.exp(
        jnp.arange(0, d_model, 2, dtype=jnp.float32)
        * (-math.log(10000.0) / d_model)
    )
    angles = position * div_term
    pe = jnp.zeros((max_len, d_model), dtype=jnp.float32)
    pe = pe.at[:, 0::2].set(jnp.sin(angles))
    pe = pe.at[:, 1::2].set(jnp.cos(angles[:, : d_model // 2]))  # odd d_model safe
    return pe


def _make_gather_kernel(tm: int, k: int, ml_pad: int, chunk: int, out_width: int):
    """One-hot MXU gather: (tm, out_width) tile per grid step, lane-dense."""
    n_chunks = ml_pad // chunk

    def kernel(idx_ref, tbl_ref, out_ref):
        # idx_ref: (tm, k) int32; entry [r, j] = row index of logical row k*r+j,
        #          pre-offset by j*ml_pad into the block-diagonal table.
        # tbl_ref: (k*ml_pad, out_width) f32, VMEM-resident (constant block).
        # out_ref: (tm, out_width) f32 output tile.
        idx_blk = idx_ref[...]
        out_ref[...] = jnp.zeros_like(out_ref)
        for j in range(k):                              # static, k in {1,2,4,8}
            col = idx_blk[:, j:j + 1]                   # (tm, 1)
            for c in range(n_chunks):                   # static
                base = j * ml_pad + c * chunk
                lane = lax.broadcasted_iota(jnp.int32, (tm, chunk), 1) + base
                one_hot = (lane == col).astype(jnp.float32)
                out_ref[...] += jnp.dot(
                    one_hot, tbl_ref[base:base + chunk, :],
                    preferred_element_type=jnp.float32)

    return kernel


def positional_encoding_forward(x: jnp.ndarray, pe: jnp.ndarray, *, tm: int = 2048) -> jnp.ndarray:
    """Equivalent of PositionalEncoding.forward: pe[x.flatten()] -> [x.size, d_model]."""
    max_len, d_model = pe.shape
    idx = jnp.clip(x.reshape(-1).astype(jnp.int32), 0, max_len - 1)
    n = int(idx.shape[0])
    if n == 0:
        return jnp.zeros((0, d_model), pe.dtype)

    # Lane packing: k logical rows per 128-lane output row when d_model | 128.
    if d_model < 128 and 128 % d_model == 0 and (128 // d_model) <= 8:
        k = 128 // d_model
        out_width = 128
    else:
        k = 1
        out_width = _round_up(d_model, 128)

    # Chunk the table axis so the in-kernel one-hot stays <= (tm, 1024).
    ml8 = _round_up(max_len, 8)
    chunk = ml8 if ml8 <= 1024 else 1024
    ml_pad = _round_up(max_len, chunk)
    k_total = k * ml_pad

    n_phys = -(-n // k)                                   # packed output rows
    tm = _round_up(max(8, min(tm, _round_up(n_phys, 8))), 8)

    table_bytes = k_total * out_width * 4
    single_buffer_table = table_bytes > (4 << 20)
    table_vmem = table_bytes * (1 if single_buffer_table else 2)

    budget = 48 << 20                    # per-TC cap, safe under v7x's 64 MiB

    def working_set(tm_):
        out_tile = tm_ * out_width * 4
        idx_tile = tm_ * 128 * 4         # lane-padded index tile (conservative)
        return table_vmem + 2 * out_tile + 2 * idx_tile + (2 << 20)

    while working_set(tm) > budget and tm > 64:
        tm //= 2
    tm = _round_up(max(8, tm), 8)

    if working_set(tm) > budget:
        # Table too large to keep VMEM-resident on any generation.
        # TODO(synk): manual double-buffered HBM row-DMA gather (pattern P4).
        return jnp.take(pe, idx, axis=0)

    n_phys_pad = _round_up(n_phys, tm)
    grid = (n_phys_pad // tm,)

    # Block-diagonal replicated table: rows [j*ml_pad, (j+1)*ml_pad) carry pe in
    # columns [j*d_model, (j+1)*d_model), zero elsewhere (k == 1 -> plain pad).
    base_tbl = jnp.pad(pe.astype(jnp.float32), ((0, ml_pad - max_len), (0, 0)))
    if k == 1:
        tbl = jnp.pad(base_tbl, ((0, 0), (0, out_width - d_model)))
    else:
        tbl = jnp.zeros((k_total, out_width), jnp.float32)
        for j in range(k):
            tbl = tbl.at[j * ml_pad:(j + 1) * ml_pad,
                         j * d_model:(j + 1) * d_model].set(base_tbl)

    # Per-tile index block: [r, j] = idx[k*r + j] + j*ml_pad. Padded logical
    # rows gather row 0 (junk, sliced off below).
    idx_p = jnp.pad(idx, (0, n_phys_pad * k - n))
    idx_mat = (idx_p.reshape(n_phys_pad, k)
               + (jnp.arange(k, dtype=jnp.int32) * ml_pad)[None, :])

    tbl_spec_kwargs = {}
    if single_buffer_table:
        # Constant block index across the grid -> one buffer suffices; halves
        # the dominant VMEM consumer (matters most under v7x's 64 MiB VMEM).
        tbl_spec_kwargs["pipeline_mode"] = pl.Buffered(1)
    tbl_spec = pl.BlockSpec((k_total, out_width), lambda i: (0, 0),
                            **tbl_spec_kwargs)

    vmem_limit = int(min(max(working_set(tm), 8 << 20), budget))

    out_p = pl.pallas_call(
        _make_gather_kernel(tm, k, ml_pad, chunk, out_width),
        out_shape=jax.ShapeDtypeStruct((n_phys_pad, out_width), jnp.float32),
        grid=grid,
        in_specs=[
            pl.BlockSpec((tm, k), lambda i: (i, 0)),     # per-tile indices (VMEM)
            tbl_spec,                                    # resident pe table
        ],
        out_specs=pl.BlockSpec((tm, out_width), lambda i: (i, 0)),
        compiler_params=pltpu.CompilerParams(
            dimension_semantics=("parallel",),           # independent tiles
            vmem_limit_bytes=vmem_limit,
        ),
        cost_estimate=pl.CostEstimate(
            flops=2 * n_phys_pad * k_total * out_width,
            transcendentals=0,
            bytes_accessed=(n_phys_pad * out_width * 4
                            + table_bytes + n_phys_pad * k * 4),
        ),
    )(idx_mat, tbl)

    if k > 1:
        # Physical row r holds logical rows k*r .. k*r+k-1 in lane order, so a
        # row-major reshape un-packs for free.
        out = out_p.reshape(n_phys_pad * k, d_model)[:n]
    else:
        out = out_p[:n, :d_model]
    return out


if __name__ == "__main__":
    d_model = 32
    max_len = 128
    seq_len = 8
    batch = 2

    pe = _build_pe_table(d_model, max_len)

    key = jax.random.PRNGKey(0)
    # x is an index tensor: values in [0, max_len), shape [seq_len, batch].
    x = jax.random.randint(key, (seq_len, batch), 0, max_len, dtype=jnp.int32)

    out = positional_encoding_forward(x, pe)
    out = jax.block_until_ready(out)

    # Reference check against plain JAX gather. The f32 one-hot MXU matmul may
    # use a multi-pass decomposition; tolerance covers that rounding while a
    # wrong gathered row would produce O(1) errors.
    ref = pe[x.reshape(-1)]
    assert out.shape == (seq_len * batch, d_model), out.shape
    assert jnp.allclose(out, ref, atol=5e-3, rtol=0.0), float(jnp.abs(out - ref).max())

    print("KERNEL_OK")
</pallas_src>

<mosaic_0001>
module attributes {stable_mosaic.version = 11 : i64} {
  func.func @kernel(%arg0: i32, %arg1: memref<8x4xi32, #tpu.memory_space<vmem>>, %arg2: memref<512x128xf32, #tpu.memory_space<vmem>>, %arg3: memref<8x128xf32, #tpu.memory_space<vmem>>) attributes {dimension_semantics = [#tpu.dimension_semantics<parallel>], iteration_bounds = array<i64: 1>, scalar_prefetch = 0 : i64, scratch_operands = 0 : i64, tpu.core_type = #tpu.core_type<tc>, window_params = [{transform_indices = @transform_0, window_bounds = array<i64: 8, 4>}, {pipeline_mode = #tpu.pipeline_mode<synchronous>, transform_indices = @transform_1, window_bounds = array<i64: 512, 128>}, {transform_indices = @transform_2, window_bounds = array<i64: 8, 128>}]} {
    %c0 = arith.constant 0 : index
    %c0_0 = arith.constant 0 : index
    %0 = vector.load %arg1[%c0, %c0_0] : memref<8x4xi32, #tpu.memory_space<vmem>>, vector<8x4xi32>
    %cst = arith.constant 0.000000e+00 : f32
    %1 = vector.broadcast %cst : f32 to vector<8x128xf32>
    %c0_1 = arith.constant 0 : index
    %c0_2 = arith.constant 0 : index
    %2 = vector.load %arg3[%c0_1, %c0_2] : memref<8x128xf32, #tpu.memory_space<vmem>>, vector<8x128xf32>
    tpu.vector_store %arg3[%c0_1, %c0_2], %1 {strides = array<i32>} : memref<8x128xf32, #tpu.memory_space<vmem>>, vector<8x128xf32>,
    %3 = vector.extract_strided_slice %0 {offsets = [0, 0], sizes = [8, 1], strides = [1, 1]} : vector<8x4xi32> to vector<8x1xi32>
    %4 = tpu.iota {dimensions = array<i32: 1>} : vector<8x128xi32>
    %c0_i32 = arith.constant 0 : i32
    %5 = vector.broadcast %c0_i32 : i32 to vector<8x128xi32>
    %6 = arith.addi %4, %5 : vector<8x128xi32>
    %7 = vector.broadcast %3 : vector<8x1xi32> to vector<8x128xi32>
    %8 = arith.cmpi eq, %6, %7 : vector<8x128xi32>
    %9 = arith.extui %8 : vector<8x128xi1> to vector<8x128xi32>
    %10 = arith.sitofp %9 : vector<8x128xi32> to vector<8x128xf32>
    %c0_3 = arith.constant 0 : index
    %c0_4 = arith.constant 0 : index
    %11 = vector.load %arg3[%c0_3, %c0_4] : memref<8x128xf32, #tpu.memory_space<vmem>>, vector<8x128xf32>
    %c0_5 = arith.constant 0 : index
    %c0_6 = arith.constant 0 : index
    %12 = vector.load %arg2[%c0_5, %c0_6] : memref<512x128xf32, #tpu.memory_space<vmem>>, vector<128x128xf32>
    %cst_7 = arith.constant dense<0.000000e+00> : vector<8x128xf32>
    %13 = tpu.matmul %10, %12, %cst_7 {dimension_numbers = #tpu.dot_dimension_numbers<[1], [0], [0], [1], [0, 0, 1, 1], [], []>} : vector<8x128xf32>, vector<128x128xf32>, vector<8x128xf32> -> vector<8x128xf32>
    %14 = arith.addf %11, %13 : vector<8x128xf32>
    %c0_8 = arith.constant 0 : index
    %c0_9 = arith.constant 0 : index
    %15 = vector.load %arg3[%c0_8, %c0_9] : memref<8x128xf32, #tpu.memory_space<vmem>>, vector<8x128xf32>
    tpu.vector_store %arg3[%c0_8, %c0_9], %14 {strides = array<i32>} : memref<8x128xf32, #tpu.memory_space<vmem>>, vector<8x128xf32>,
    %16 = vector.extract_strided_slice %0 {offsets = [0, 1], sizes = [8, 1], strides = [1, 1]} : vector<8x4xi32> to vector<8x1xi32>
    %17 = tpu.iota {dimensions = array<i32: 1>} : vector<8x128xi32>
    %c128_i32 = arith.constant 128 : i32
    %18 = vector.broadcast %c128_i32 : i32 to vector<8x128xi32>
    %19 = arith.addi %17, %18 : vector<8x128xi32>
    %20 = vector.broadcast %16 : vector<8x1xi32> to vector<8x128xi32>
    %21 = arith.cmpi eq, %19, %20 : vector<8x128xi32>
    %22 = arith.extui %21 : vector<8x128xi1> to vector<8x128xi32>
    %23 = arith.sitofp %22 : vector<8x128xi32> to vector<8x128xf32>
    %c0_10 = arith.constant 0 : index
    %c0_11 = arith.constant 0 : index
    %24 = vector.load %arg3[%c0_10, %c0_11] : memref<8x128xf32, #tpu.memory_space<vmem>>, vector<8x128xf32>
    %c128 = arith.constant 128 : index
    %c0_12 = arith.constant 0 : index
    %25 = vector.load %arg2[%c128, %c0_12] : memref<512x128xf32, #tpu.memory_space<vmem>>, vector<128x128xf32>
    %cst_13 = arith.constant dense<0.000000e+00> : vector<8x128xf32>
    %26 = tpu.matmul %23, %25, %cst_13 {dimension_numbers = #tpu.dot_dimension_numbers<[1], [0], [0], [1], [0, 0, 1, 1], [], []>} : vector<8x128xf32>, vector<128x128xf32>, vector<8x128xf32> -> vector<8x128xf32>
    %27 = arith.addf %24, %26 : vector<8x128xf32>
    %c0_14 = arith.constant 0 : index
    %c0_15 = arith.constant 0 : index
    %28 = vector.load %arg3[%c0_14, %c0_15] : memref<8x128xf32, #tpu.memory_space<vmem>>, vector<8x128xf32>
    tpu.vector_store %arg3[%c0_14, %c0_15], %27 {strides = array<i32>} : memref<8x128xf32, #tpu.memory_space<vmem>>, vector<8x128xf32>,
    %29 = vector.extract_strided_slice %0 {offsets = [0, 2], sizes = [8, 1], strides = [1, 1]} : vector<8x4xi32> to vector<8x1xi32>
    %30 = tpu.iota {dimensions = array<i32: 1>} : vector<8x128xi32>
    %c256_i32 = arith.constant 256 : i32
    %31 = vector.broadcast %c256_i32 : i32 to vector<8x128xi32>
    %32 = arith.addi %30, %31 : vector<8x128xi32>
    %33 = vector.broadcast %29 : vector<8x1xi32> to vector<8x128xi32>
    %34 = arith.cmpi eq, %32, %33 : vector<8x128xi32>
    %35 = arith.extui %34 : vector<8x128xi1> to vector<8x128xi32>
    %36 = arith.sitofp %35 : vector<8x128xi32> to vector<8x128xf32>
    %c0_16 = arith.constant 0 : index
    %c0_17 = arith.constant 0 : index
    %37 = vector.load %arg3[%c0_16, %c0_17] : memref<8x128xf32, #tpu.memory_space<vmem>>, vector<8x128xf32>
    %c256 = arith.constant 256 : index
    %c0_18 = arith.constant 0 : index
    %38 = vector.load %arg2[%c256, %c0_18] : memref<512x128xf32, #tpu.memory_space<vmem>>, vector<128x128xf32>
    %cst_19 = arith.constant dense<0.000000e+00> : vector<8x128xf32>
    %39 = tpu.matmul %36, %38, %cst_19 {dimension_numbers = #tpu.dot_dimension_numbers<[1], [0], [0], [1], [0, 0, 1, 1], [], []>} : vector<8x128xf32>, vector<128x128xf32>, vector<8x128xf32> -> vector<8x128xf32>
    %40 = arith.addf %37, %39 : vector<8x128xf32>
    %c0_20 = arith.constant 0 : index
    %c0_21 = arith.constant 0 : index
    %41 = vector.load %arg3[%c0_20, %c0_21] : memref<8x128xf32, #tpu.memory_space<vmem>>, vector<8x128xf32>
    tpu.vector_store %arg3[%c0_20, %c0_21], %40 {strides = array<i32>} : memref<8x128xf32, #tpu.memory_space<vmem>>, vector<8x128xf32>,
    %42 = vector.extract_strided_slice %0 {offsets = [0, 3], sizes = [8, 1], strides = [1, 1]} : vector<8x4xi32> to vector<8x1xi32>
    %43 = tpu.iota {dimensions = array<i32: 1>} : vector<8x128xi32>
    %c384_i32 = arith.constant 384 : i32
    %44 = vector.broadcast %c384_i32 : i32 to vector<8x128xi32>
    %45 = arith.addi %43, %44 : vector<8x128xi32>
    %46 = vector.broadcast %42 : vector<8x1xi32> to vector<8x128xi32>
    %47 = arith.cmpi eq, %45, %46 : vector<8x128xi32>
    %48 = arith.extui %47 : vector<8x128xi1> to vector<8x128xi32>
    %49 = arith.sitofp %48 : vector<8x128xi32> to vector<8x128xf32>
    %c0_22 = arith.constant 0 : index
    %c0_23 = arith.constant 0 : index
    %50 = vector.load %arg3[%c0_22, %c0_23] : memref<8x128xf32, #tpu.memory_space<vmem>>, vector<8x128xf32>
    %c384 = arith.constant 384 : index
    %c0_24 = arith.constant 0 : index
    %51 = vector.load %arg2[%c384, %c0_24] : memref<512x128xf32, #tpu.memory_space<vmem>>, vector<128x128xf32>
    %cst_25 = arith.constant dense<0.000000e+00> : vector<8x128xf32>
    %52 = tpu.matmul %49, %51, %cst_25 {dimension_numbers = #tpu.dot_dimension_numbers<[1], [0], [0], [1], [0, 0, 1, 1], [], []>} : vector<8x128xf32>, vector<128x128xf32>, vector<8x128xf32> -> vector<8x128xf32>
    %53 = arith.addf %50, %52 : vector<8x128xf32>
    %c0_26 = arith.constant 0 : index
    %c0_27 = arith.constant 0 : index
    %54 = vector.load %arg3[%c0_26, %c0_27] : memref<8x128xf32, #tpu.memory_space<vmem>>, vector<8x128xf32>
    tpu.vector_store %arg3[%c0_26, %c0_27], %53 {strides = array<i32>} : memref<8x128xf32, #tpu.memory_space<vmem>>, vector<8x128xf32>,
    return
  }
  func.func @transform_0(%arg0: i32) -> (i32, i32) {
    %c0_i32 = arith.constant 0 : i32
    %c0_i32_0 = arith.constant 0 : i32
    return %arg0, %c0_i32 : i32, i32
  }
  func.func @transform_1(%arg0: i32) -> (i32, i32) {
    %c0_i32 = arith.constant 0 : i32
    %c0_i32_0 = arith.constant 0 : i32
    %c0_i32_1 = arith.constant 0 : i32
    return %c0_i32, %c0_i32_0 : i32, i32
  }
  func.func @transform_2(%arg0: i32) -> (i32, i32) {
    %c0_i32 = arith.constant 0 : i32
    %c0_i32_0 = arith.constant 0 : i32
    return %arg0, %c0_i32 : i32, i32
  }
}

</mosaic_0001>

<llo_original>
// kernel: tpu_custom_call.1
$region0: #{tpu_custom_call.1}
  #allocation0 [shape = 'u32[]', space=smem, size = 0x4, offset = 0x4, fixed_abs, tag = 'smem constant byte address 0x4 - core index']
  #allocation1 [shape = 'u32[72,128]{1,0:T(1,128)}', space=vmem, size = 0x9000, scoped, tag = 'internal scratch']
  %s0 = inlined_call_operand.vmem [shape: s32[8,4], index: 0, kind: input, shape index: {}]
  %s1 = inlined_call_operand.hbm [shape: f32[512,128], index: 1, kind: input, shape index: {}]
  %s2 = inlined_call_operand.hbm [shape: f32[8,128], index: 2, kind: output, shape index: {}]
  %s3 = sld [smem:[#allocation0]]
  $region22: #{tpu_custom_call.1} parent=0
    _
  %s5 = ssub.s32 1, %s3
  %s6 = scalar_select 0, %s5, %s3
  $region1: #{tpu_custom_call.1} parent=0
    #allocation2 [shape = 'u8[262144]{0}', space=vmem, size = 0x40000, scoped, tag = 'input window, operand 1, single buffered']
    #allocation3 [shape = 's32[1]{0}', space=sflag, size = 0x4, scoped, tag = 'scoped memory for tpu_custom_call.1']
    #allocation4 [shape = 's32[1]{0}', space=sflag, size = 0x4, scoped, tag = 'scoped memory for tpu_custom_call.1']
    #allocation5 [shape = 'u8[4096]{0}', space=vmem, size = 0x1000, scoped, tag = 'output window, operand 0, single buffered']
    %7 = vsyncpa [#allocation3], 0
    %8 = vsyncpa [#allocation4], 0
    // Predicated region
    $region2: #{tpu_custom_call.1} parent=1 // pred_check
      _
    $region3: #{tpu_custom_call.1} parent=1 // pred_check_branch
      %10 = sbr.rel (0) target = $region5
    $region4: #{tpu_custom_call.1} parent=1 // pred_region
      _
    $region5: #{tpu_custom_call.1} parent=1 // pred_fallthru
      _
    // Predicated region
    $region6: #{tpu_custom_call.1} parent=1 // pred_check
      _
    $region7: #{tpu_custom_call.1} parent=1 // pred_check_branch
      %12 = sbr.rel (0) target = $region9
    $region8: #{tpu_custom_call.1} parent=1 // pred_region
      %14 = vsyncadd [#allocation3], 0
      %s15 = sshll.u32 %s1, 4
      %s16 = int_to_ptr.hbm [resolvable:$true] %s15
      %s17 = sshll.u32 [#allocation2], 4
      %s18 = int_to_ptr.vmem [resolvable:$true] %s17
      %23 = dma.hbm_to_vmem [thread:$0]  %s16, 8192, %s18, [#allocation3], 128, 128, 8
    $region9: #{tpu_custom_call.1} parent=1 // pred_fallthru
      _
    // Predicated region
    $region10: #{tpu_custom_call.1} parent=1 // pred_check
      _
    $region11: #{tpu_custom_call.1} parent=1 // pred_check_branch
      %25 = sbr.rel (0) target = $region13
    $region12: #{tpu_custom_call.1} parent=1 // pred_region
      %27 = dma.done [#allocation3], 8192
    $region13: #{tpu_custom_call.1} parent=1 // pred_fallthru
      _
    %v28 = vld [vmem:[%s0] sm:$0xff]
    %29 = vst [vmem:[#allocation5] sm:$0xff] 0.0
    %v30 = vlaneseq
    %v31 = vand.u32 %v30, 127
    %32 = vset.pattern.permute.xlu0 0
    %33 = vperm.xlu0 %32, %v28
    %v34 = vpop.permute.xlu0 %33
    %vm35 = vcmp.eq.s32.totalorder %v31, %v34
    %v36 = vsel %vm35, 1, 0
    %v37 = vcvt.s32.f32 %v36
    %v38 = vld [vmem:[#allocation5] sm:$0xff]
    %v39 = vld [vmem:[#allocation2] sm:$0xff]
    %v40 = vld [vmem:[#allocation2 + $0x8] sm:$0xff]
    %v41 = vld [vmem:[#allocation2 + $0x10] sm:$0xff]
    %v42 = vld [vmem:[#allocation2 + $0x18] sm:$0xff]
    %v43 = vld [vmem:[#allocation2 + $0x20] sm:$0xff]
    %v44 = vld [vmem:[#allocation2 + $0x28] sm:$0xff]
    %v45 = vld [vmem:[#allocation2 + $0x30] sm:$0xff]
    %v46 = vld [vmem:[#allocation2 + $0x38] sm:$0xff]
    %v47 = vld [vmem:[#allocation2 + $0x40] sm:$0xff]
    %v48 = vld [vmem:[#allocation2 + $0x48] sm:$0xff]
    %v49 = vld [vmem:[#allocation2 + $0x50] sm:$0xff]
    %v50 = vld [vmem:[#allocation2 + $0x58] sm:$0xff]
    %v51 = vld [vmem:[#allocation2 + $0x60] sm:$0xff]
    %v52 = vld [vmem:[#allocation2 + $0x68] sm:$0xff]
    %v53 = vld [vmem:[#allocation2 + $0x70] sm:$0xff]
    %v54 = vld [vmem:[#allocation2 + $0x78] sm:$0xff]
    %55 = vmatpush.msra.mxu0 %v54
    %56 = vmatpush.msra.mxu0 %v53
    %57 = vmatpush.msra.mxu0 %v52
    %58 = vmatpush.msra.mxu0 %v51
    %59 = vmatpush.msra.mxu0 %v50
    %60 = vmatpush.msra.mxu0 %v49
    %61 = vmatpush.msra.mxu0 %v48
    %62 = vmatpush.msra.mxu0 %v47
    %63 = vmatpush.msra.mxu0 %v46
    %64 = vmatpush.msra.mxu0 %v45
    %65 = vmatpush.msra.mxu0 %v44
    %66 = vmatpush.msra.mxu0 %v43
    %67 = vmatpush.msra.mxu0 %v42
    %68 = vmatpush.msra.mxu0 %v41
    %69 = vmatpush.msra.mxu0 %v40
    %70 = vmatpush.msra.mxu0 %v39
    %71 = vmatmul.f32.gmra.mxu0 %v37
    %v72 = vpop.f32.mrf.mxu0
    %v73 = vadd.f32 0.0, %v72
    %74 = vdwg.mxu0
    %v75 = vadd.f32 %v38, %v73
    %76 = vst [vmem:[#allocation5] sm:$0xff] %v75
    %v77 = vadd.s32 %v31, 128
    %78 = vset.pattern.permute.xlu0 1
    %79 = vperm.xlu0 %78, %v28
    %v80 = vpop.permute.xlu0 %79
    %vm81 = vcmp.eq.s32.totalorder %v77, %v80
    %v82 = vsel %vm81, 1, 0
    %v83 = vcvt.s32.f32 %v82
    %v84 = vld [vmem:[#allocation5] sm:$0xff]
    %v85 = vld [vmem:[#allocation2 + $0x80] sm:$0xff]
    %v86 = vld [vmem:[#allocation2 + $0x88] sm:$0xff]
    %v87 = vld [vmem:[#allocation2 + $0x90] sm:$0xff]
    %v88 = vld [vmem:[#allocation2 + $0x98] sm:$0xff]
    %v89 = vld [vmem:[#allocation2 + $0xa0] sm:$0xff]
    %v90 = vld [vmem:[#allocation2 + $0xa8] sm:$0xff]
    %v91 = vld [vmem:[#allocation2 + $0xb0] sm:$0xff]
    %v92 = vld [vmem:[#allocation2 + $0xb8] sm:$0xff]
    %v93 = vld [vmem:[#allocation2 + $0xc0] sm:$0xff]
    %v94 = vld [vmem:[#allocation2 + $0xc8] sm:$0xff]
    %v95 = vld [vmem:[#allocation2 + $0xd0] sm:$0xff]
    %v96 = vld [vmem:[#allocation2 + $0xd8] sm:$0xff]
    %v97 = vld [vmem:[#allocation2 + $0xe0] sm:$0xff]
    %v98 = vld [vmem:[#allocation2 + $0xe8] sm:$0xff]
    %v99 = vld [vmem:[#allocation2 + $0xf0] sm:$0xff]
    %v100 = vld [vmem:[#allocation2 + $0xf8] sm:$0xff]
    %101 = vmatpush.msra.mxu0 %v100
    %102 = vmatpush.msra.mxu0 %v99
    %103 = vmatpush.msra.mxu0 %v98
    %104 = vmatpush.msra.mxu0 %v97
    %105 = vmatpush.msra.mxu0 %v96
    %106 = vmatpush.msra.mxu0 %v95
    %107 = vmatpush.msra.mxu0 %v94
    %108 = vmatpush.msra.mxu0 %v93
    %109 = vmatpush.msra.mxu0 %v92
    %110 = vmatpush.msra.mxu0 %v91
    %111 = vmatpush.msra.mxu0 %v90
    %112 = vmatpush.msra.mxu0 %v89
    %113 = vmatpush.msra.mxu0 %v88
    %114 = vmatpush.msra.mxu0 %v87
    %115 = vmatpush.msra.mxu0 %v86
    %116 = vmatpush.msra.mxu0 %v85
    %117 = vmatmul.f32.gmra.mxu0 %v83
    %v118 = vpop.f32.mrf.mxu0
    %v119 = vadd.f32 0.0, %v118
    %120 = vdwg.mxu0
    %v121 = vadd.f32 %v84, %v119
    %122 = vst [vmem:[#allocation5] sm:$0xff] %v121
    %v123 = vadd.s32 %v31, 256
    %124 = vset.pattern.permute.xlu0 2
    %125 = vperm.xlu0 %124, %v28
    %v126 = vpop.permute.xlu0 %125
    %vm127 = vcmp.eq.s32.totalorder %v123, %v126
    %v128 = vsel %vm127, 1, 0
    %v129 = vcvt.s32.f32 %v128
    %v130 = vld [vmem:[#allocation5] sm:$0xff]
    %v131 = vld [vmem:[#allocation2 + $0x100] sm:$0xff]
    %v132 = vld [vmem:[#allocation2 + $0x108] sm:$0xff]
    %v133 = vld [vmem:[#allocation2 + $0x110] sm:$0xff]
    %v134 = vld [vmem:[#allocation2 + $0x118] sm:$0xff]
    %v135 = vld [vmem:[#allocation2 + $0x120] sm:$0xff]
    %v136 = vld [vmem:[#allocation2 + $0x128] sm:$0xff]
    %v137 = vld [vmem:[#allocation2 + $0x130] sm:$0xff]
    %v138 = vld [vmem:[#allocation2 + $0x138] sm:$0xff]
    %v139 = vld [vmem:[#allocation2 + $0x140] sm:$0xff]
    %v140 = vld [vmem:[#allocation2 + $0x148] sm:$0xff]
    %v141 = vld [vmem:[#allocation2 + $0x150] sm:$0xff]
    %v142 = vld [vmem:[#allocation2 + $0x158] sm:$0xff]
    %v143 = vld [vmem:[#allocation2 + $0x160] sm:$0xff]
    %v144 = vld [vmem:[#allocation2 + $0x168] sm:$0xff]
    %v145 = vld [vmem:[#allocation2 + $0x170] sm:$0xff]
    %v146 = vld [vmem:[#allocation2 + $0x178] sm:$0xff]
    %147 = vmatpush.msra.mxu0 %v146
    %148 = vmatpush.msra.mxu0 %v145
    %149 = vmatpush.msra.mxu0 %v144
    %150 = vmatpush.msra.mxu0 %v143
    %151 = vmatpush.msra.mxu0 %v142
    %152 = vmatpush.msra.mxu0 %v141
    %153 = vmatpush.msra.mxu0 %v140
    %154 = vmatpush.msra.mxu0 %v139
    %155 = vmatpush.msra.mxu0 %v138
    %156 = vmatpush.msra.mxu0 %v137
    %157 = vmatpush.msra.mxu0 %v136
    %158 = vmatpush.msra.mxu0 %v135
    %159 = vmatpush.msra.mxu0 %v134
    %160 = vmatpush.msra.mxu0 %v133
    %161 = vmatpush.msra.mxu0 %v132
    %162 = vmatpush.msra.mxu0 %v131
    %163 = vmatmul.f32.gmra.mxu0 %v129
    %v164 = vpop.f32.mrf.mxu0
    %v165 = vadd.f32 0.0, %v164
    %166 = vdwg.mxu0
    %v167 = vadd.f32 %v130, %v165
    %168 = vst [vmem:[#allocation5] sm:$0xff] %v167
    %v169 = vadd.s32 %v31, 384
    %170 = vset.pattern.permute.xlu0 3
    %171 = vperm.xlu0 %170, %v28
    %v172 = vpop.permute.xlu0 %171
    %vm173 = vcmp.eq.s32.totalorder %v169, %v172
    %v174 = vsel %vm173, 1, 0
    %v175 = vcvt.s32.f32 %v174
    %v176 = vld [vmem:[#allocation5] sm:$0xff]
    %v177 = vld [vmem:[#allocation2 + $0x180] sm:$0xff]
    %v178 = vld [vmem:[#allocation2 + $0x188] sm:$0xff]
    %v179 = vld [vmem:[#allocation2 + $0x190] sm:$0xff]
    %v180 = vld [vmem:[#allocation2 + $0x198] sm:$0xff]
    %v181 = vld [vmem:[#allocation2 + $0x1a0] sm:$0xff]
    %v182 = vld [vmem:[#allocation2 + $0x1a8] sm:$0xff]
    %v183 = vld [vmem:[#allocation2 + $0x1b0] sm:$0xff]
    %v184 = vld [vmem:[#allocation2 + $0x1b8] sm:$0xff]
    %v185 = vld [vmem:[#allocation2 + $0x1c0] sm:$0xff]
    %v186 = vld [vmem:[#allocation2 + $0x1c8] sm:$0xff]
    %v187 = vld [vmem:[#allocation2 + $0x1d0] sm:$0xff]
    %v188 = vld [vmem:[#allocation2 + $0x1d8] sm:$0xff]
    %v189 = vld [vmem:[#allocation2 + $0x1e0] sm:$0xff]
    %v190 = vld [vmem:[#allocation2 + $0x1e8] sm:$0xff]
    %v191 = vld [vmem:[#allocation2 + $0x1f0] sm:$0xff]
    %v192 = vld [vmem:[#allocation2 + $0x1f8] sm:$0xff]
    %193 = vmatpush.msra.mxu0 %v192
    %194 = vmatpush.msra.mxu0 %v191
    %195 = vmatpush.msra.mxu0 %v190
    %196 = vmatpush.msra.mxu0 %v189
    %197 = vmatpush.msra.mxu0 %v188
    %198 = vmatpush.msra.mxu0 %v187
    %199 = vmatpush.msra.mxu0 %v186
    %200 = vmatpush.msra.mxu0 %v185
    %201 = vmatpush.msra.mxu0 %v184
    %202 = vmatpush.msra.mxu0 %v183
    %203 = vmatpush.msra.mxu0 %v182
    %204 = vmatpush.msra.mxu0 %v181
    %205 = vmatpush.msra.mxu0 %v180
    %206 = vmatpush.msra.mxu0 %v179
    %207 = vmatpush.msra.mxu0 %v178
    %208 = vmatpush.msra.mxu0 %v177
    %209 = vmatmul.f32.gmra.mxu0 %v175
    %v210 = vpop.f32.mrf.mxu0
    %v211 = vadd.f32 0.0, %v210
    %212 = vdwg.mxu0
    %v213 = vadd.f32 %v176, %v211
    %214 = vst [vmem:[#allocation5] sm:$0xff] %v213
    // Predicated region
    $region14: #{tpu_custom_call.1} parent=1 // pred_check
      _
    $region15: #{tpu_custom_call.1} parent=1 // pred_check_branch
      %216 = sbr.rel (0) target = $region17
    $region16: #{tpu_custom_call.1} parent=1 // pred_region
      %218 = vsyncadd [#allocation4], 0
      %s220 = sshll.u32 [#allocation5], 4
      %s221 = int_to_ptr.vmem [resolvable:$true] %s220
      %s222 = sshll.u32 %s2, 4
      %s223 = int_to_ptr.hbm [resolvable:$true] %s222
      %225 = dma.vmem_to_hbm [thread:$0]  %s221, 128, %s223, [#allocation4]
    $region17: #{tpu_custom_call.1} parent=1 // pred_fallthru
      _
    // Predicated region
    $region18: #{tpu_custom_call.1} parent=1 // pred_check
      _
    $region19: #{tpu_custom_call.1} parent=1 // pred_check_branch
      %227 = sbr.rel (0) target = $region21
    $region20: #{tpu_custom_call.1} parent=1 // pred_region
      %229 = dma.done [#allocation4], 128
    $region21: #{tpu_custom_call.1} parent=1 // pred_fallthru
      _
    %230 = vsyncpa [#allocation3], 1
    %231 = vsyncpa [#allocation4], 1

</llo_original>
